<compile_context>
chip_gen: v5e
topology: v5e:2x2
jax: 0.10.0
libtpu: 0.0.40
codegen_flags: <defaults>
</compile_context>

<pallas_src>
import jax
import jax.numpy as jnp
import numpy as np
from jax.experimental import pallas as pl
from jax.experimental.pallas import tpu as pltpu

F = 13                      # number of candidate features
SIM_COLS = (1, 2, 0, 3)     # [jacc, lev, jw, spacy]
BLINK_COL = 10              # scores['blink']
LANES = 128                 # batch rows mapped onto TPU lanes
N_FEATS = 5                 # 4 gated sim features + blink


def _round_up(a, b):
    return ((a + b - 1) // b) * b


def lnn_kernel(p_ref, slab_ref, o_ref):
    """
    p_ref   : SMEM (12,) f32 packed params =
              [sigmoid(threshold)[0:4], or_w[0:4], or_beta, and_w[0:2], and_beta]
    slab_ref: VMEM (5, TR, 128) f32 — rows 0..3 = sim cols [1, 2, 0, 3], row 4 = blink
    o_ref   : VMEM (TR, 128) f32 — yhat, lane-dense
    """
    acc = jnp.zeros(o_ref.shape, jnp.float32)
    # Unrolled over the 4 gated similarity features; every op is a full-width
    # (TR, 128) vector op (rows live on lanes/sublanes).
    for j in range(4):
        f = slab_ref[j]                                    # (TR, 128)
        gated = f * jax.nn.sigmoid(f - p_ref[j])           # gate vs sigmoid(threshold_j)
        acc = acc + p_ref[4 + j] * gated                   # weighted Lukasiewicz OR sum

    disj = jnp.clip(1.0 - p_ref[8] + acc, 0.0, 1.0)        # OR (disjunction)

    blink = slab_ref[4]                                    # (TR, 128)
    yhat = jnp.clip(
        p_ref[11]
        - p_ref[9] * (1.0 - blink)                         # AND over [blink, disj]
        - p_ref[10] * (1.0 - disj),
        0.0, 1.0)
    o_ref[...] = yhat.astype(o_ref.dtype)


def init_params():
    # threshold: nn.Parameter([0.5, 0.5, 0.5, 0.5]).view(1, 4)
    # OR gate (arity 4) and AND gate (arity 2): beta = 1.0, weights = 1.0
    return {
        "threshold": jnp.full((1, 4), 0.5, jnp.float32),
        "or_w":      jnp.ones((1, 4), jnp.float32),
        "or_beta":   jnp.ones((1, 1), jnp.float32),
        "and_w":     jnp.ones((1, 2), jnp.float32),
        "and_beta":  jnp.ones((1, 1), jnp.float32),
    }


def pure_name_lnn_blink(x, params, *, tile_rows=512):
    """x: (N, 13) float32 feature rows -> yhat (N, 1) float32."""
    N, Fx = x.shape
    assert Fx == F, f"expected {F} features, got {Fx}"

    # Collapse all gate scalars into one tiny SMEM operand; precompute
    # sigmoid(threshold) once here instead of per grid step.
    packed = jnp.concatenate([
        jax.nn.sigmoid(params["threshold"].reshape(-1)),   # [0:4]  sigmoid(threshold)
        params["or_w"].reshape(-1),                        # [4:8]  OR weights
        params["or_beta"].reshape(-1),                     # [8]    OR beta
        params["and_w"].reshape(-1),                       # [9:11] AND weights
        params["and_beta"].reshape(-1),                    # [11]   AND beta
    ]).astype(jnp.float32)                                 # (12,)

    # Prune to the 5 used columns and make batch rows lane-dense:
    # slab[j, r, l] = feature j of original row (r * 128 + l).
    feats = jnp.stack([x[:, c] for c in SIM_COLS + (BLINK_COL,)], axis=0)
    feats = feats.astype(jnp.float32)                      # (5, N)

    R = pl.cdiv(N, LANES)                                  # rows of the 2-D layout
    num_tiles = max(1, pl.cdiv(R, tile_rows))
    tr = _round_up(pl.cdiv(R, num_tiles), 8)               # sublane-aligned row tile
    R_pad = num_tiles * tr
    N_pad = R_pad * LANES

    slab = jnp.pad(feats, ((0, 0), (0, N_pad - N))).reshape(N_FEATS, R_pad, LANES)

    out = pl.pallas_call(
        lnn_kernel,
        out_shape=jax.ShapeDtypeStruct((R_pad, LANES), jnp.float32),
        grid=(num_tiles,),
        in_specs=[
            pl.BlockSpec(memory_space=pltpu.MemorySpace.SMEM),          # packed params
            pl.BlockSpec((N_FEATS, tr, LANES), lambda i: (0, i, 0)),    # feature slab
        ],
        out_specs=pl.BlockSpec((tr, LANES), lambda i: (i, 0)),          # lane-dense yhat
        compiler_params=pltpu.CompilerParams(dimension_semantics=("parallel",)),
    )(packed, slab)

    return out.reshape(N_pad)[:N][:, None]


def reference(x, params):
    # Pure-JAX mirror of the PyTorch forward for correctness checking.
    sim = x[:, list(SIM_COLS)]
    sim_ = sim * jax.nn.sigmoid(sim - jax.nn.sigmoid(params["threshold"]))
    disj = jnp.clip(1.0 - params["or_beta"][0, 0] + sim_ @ params["or_w"][0],
                    0.0, 1.0)[:, None]
    blink = x[:, BLINK_COL:BLINK_COL + 1]
    cat = jnp.concatenate([blink, disj], axis=1)
    yhat = jnp.clip(params["and_beta"][0, 0]
                    - ((1.0 - cat) * params["and_w"][0]).sum(axis=1),
                    0.0, 1.0)[:, None]
    return yhat


if __name__ == "__main__":
    key = jax.random.PRNGKey(0)
    N = 200   # deliberately not a multiple of 8 or 128 to exercise padding path
    # feature scores live in [0, 1]
    x = jax.random.uniform(key, (N, F), dtype=jnp.float32)

    params = init_params()

    yhat = pure_name_lnn_blink(x, params)
    yhat = jax.block_until_ready(yhat)

    y_ref = reference(x, params)
    np.testing.assert_allclose(np.asarray(yhat), np.asarray(y_ref),
                               rtol=1e-5, atol=1e-5)
    assert yhat.shape == (N, 1)
    print("KERNEL_OK")
</pallas_src>

<mosaic_0001>
module attributes {stable_mosaic.version = 11 : i64} {
  func.func @lnn_kernel(%arg0: i32, %arg1: memref<12xf32, #tpu.memory_space<smem>>, %arg2: memref<5x8x128xf32, #tpu.memory_space<vmem>>, %arg3: memref<8x128xf32, #tpu.memory_space<vmem>>) attributes {dimension_semantics = [#tpu.dimension_semantics<parallel>], iteration_bounds = array<i64: 1>, scalar_prefetch = 0 : i64, scratch_operands = 0 : i64, tpu.core_type = #tpu.core_type<tc>, window_params = [{transform_indices = @transform_0, window_bounds = array<i64: 12>}, {transform_indices = @transform_1, window_bounds = array<i64: 5, 8, 128>}, {transform_indices = @transform_2, window_bounds = array<i64: 8, 128>}]} {
    %cst = arith.constant 0.000000e+00 : f32
    %0 = vector.broadcast %cst : f32 to vector<8x128xf32>
    %c0 = arith.constant 0 : index
    %c0_0 = arith.constant 0 : index
    %c0_1 = arith.constant 0 : index
    %1 = vector.load %arg2[%c0, %c0_0, %c0_1] : memref<5x8x128xf32, #tpu.memory_space<vmem>>, vector<1x8x128xf32>
    %2 = vector.shape_cast %1 : vector<1x8x128xf32> to vector<8x128xf32>
    %c0_2 = arith.constant 0 : index
    %3 = memref.load %arg1[%c0_2] : memref<12xf32, #tpu.memory_space<smem>>
    %4 = vector.broadcast %3 : f32 to vector<8x128xf32>
    %5 = arith.subf %2, %4 : vector<8x128xf32>
    %6 = arith.negf %5 : vector<8x128xf32>
    %7 = math.exp %6 : vector<8x128xf32>
    %cst_3 = arith.constant 1.000000e+00 : f32
    %8 = vector.broadcast %cst_3 : f32 to vector<8x128xf32>
    %9 = arith.addf %8, %7 : vector<8x128xf32>
    %10 = arith.divf %8, %9 : vector<8x128xf32>
    %11 = arith.mulf %2, %10 : vector<8x128xf32>
    %c4 = arith.constant 4 : index
    %12 = memref.load %arg1[%c4] : memref<12xf32, #tpu.memory_space<smem>>
    %13 = vector.broadcast %12 : f32 to vector<8x128xf32>
    %14 = arith.mulf %13, %11 : vector<8x128xf32>
    %15 = arith.addf %0, %14 : vector<8x128xf32>
    %c1 = arith.constant 1 : index
    %c0_4 = arith.constant 0 : index
    %c0_5 = arith.constant 0 : index
    %16 = vector.load %arg2[%c1, %c0_4, %c0_5] : memref<5x8x128xf32, #tpu.memory_space<vmem>>, vector<1x8x128xf32>
    %17 = vector.shape_cast %16 : vector<1x8x128xf32> to vector<8x128xf32>
    %c1_6 = arith.constant 1 : index
    %18 = memref.load %arg1[%c1_6] : memref<12xf32, #tpu.memory_space<smem>>
    %19 = vector.broadcast %18 : f32 to vector<8x128xf32>
    %20 = arith.subf %17, %19 : vector<8x128xf32>
    %21 = arith.negf %20 : vector<8x128xf32>
    %22 = math.exp %21 : vector<8x128xf32>
    %cst_7 = arith.constant 1.000000e+00 : f32
    %23 = vector.broadcast %cst_7 : f32 to vector<8x128xf32>
    %24 = arith.addf %23, %22 : vector<8x128xf32>
    %25 = arith.divf %23, %24 : vector<8x128xf32>
    %26 = arith.mulf %17, %25 : vector<8x128xf32>
    %c5 = arith.constant 5 : index
    %27 = memref.load %arg1[%c5] : memref<12xf32, #tpu.memory_space<smem>>
    %28 = vector.broadcast %27 : f32 to vector<8x128xf32>
    %29 = arith.mulf %28, %26 : vector<8x128xf32>
    %30 = arith.addf %15, %29 : vector<8x128xf32>
    %c2 = arith.constant 2 : index
    %c0_8 = arith.constant 0 : index
    %c0_9 = arith.constant 0 : index
    %31 = vector.load %arg2[%c2, %c0_8, %c0_9] : memref<5x8x128xf32, #tpu.memory_space<vmem>>, vector<1x8x128xf32>
    %32 = vector.shape_cast %31 : vector<1x8x128xf32> to vector<8x128xf32>
    %c2_10 = arith.constant 2 : index
    %33 = memref.load %arg1[%c2_10] : memref<12xf32, #tpu.memory_space<smem>>
    %34 = vector.broadcast %33 : f32 to vector<8x128xf32>
    %35 = arith.subf %32, %34 : vector<8x128xf32>
    %36 = arith.negf %35 : vector<8x128xf32>
    %37 = math.exp %36 : vector<8x128xf32>
    %cst_11 = arith.constant 1.000000e+00 : f32
    %38 = vector.broadcast %cst_11 : f32 to vector<8x128xf32>
    %39 = arith.addf %38, %37 : vector<8x128xf32>
    %40 = arith.divf %38, %39 : vector<8x128xf32>
    %41 = arith.mulf %32, %40 : vector<8x128xf32>
    %c6 = arith.constant 6 : index
    %42 = memref.load %arg1[%c6] : memref<12xf32, #tpu.memory_space<smem>>
    %43 = vector.broadcast %42 : f32 to vector<8x128xf32>
    %44 = arith.mulf %43, %41 : vector<8x128xf32>
    %45 = arith.addf %30, %44 : vector<8x128xf32>
    %c3 = arith.constant 3 : index
    %c0_12 = arith.constant 0 : index
    %c0_13 = arith.constant 0 : index
    %46 = vector.load %arg2[%c3, %c0_12, %c0_13] : memref<5x8x128xf32, #tpu.memory_space<vmem>>, vector<1x8x128xf32>
    %47 = vector.shape_cast %46 : vector<1x8x128xf32> to vector<8x128xf32>
    %c3_14 = arith.constant 3 : index
    %48 = memref.load %arg1[%c3_14] : memref<12xf32, #tpu.memory_space<smem>>
    %49 = vector.broadcast %48 : f32 to vector<8x128xf32>
    %50 = arith.subf %47, %49 : vector<8x128xf32>
    %51 = arith.negf %50 : vector<8x128xf32>
    %52 = math.exp %51 : vector<8x128xf32>
    %cst_15 = arith.constant 1.000000e+00 : f32
    %53 = vector.broadcast %cst_15 : f32 to vector<8x128xf32>
    %54 = arith.addf %53, %52 : vector<8x128xf32>
    %55 = arith.divf %53, %54 : vector<8x128xf32>
    %56 = arith.mulf %47, %55 : vector<8x128xf32>
    %c7 = arith.constant 7 : index
    %57 = memref.load %arg1[%c7] : memref<12xf32, #tpu.memory_space<smem>>
    %58 = vector.broadcast %57 : f32 to vector<8x128xf32>
    %59 = arith.mulf %58, %56 : vector<8x128xf32>
    %60 = arith.addf %45, %59 : vector<8x128xf32>
    %c8 = arith.constant 8 : index
    %61 = memref.load %arg1[%c8] : memref<12xf32, #tpu.memory_space<smem>>
    %cst_16 = arith.constant 1.000000e+00 : f32
    %62 = arith.subf %cst_16, %61 : f32
    %63 = vector.broadcast %62 : f32 to vector<8x128xf32>
    %64 = arith.addf %63, %60 : vector<8x128xf32>
    %cst_17 = arith.constant 0.000000e+00 : f32
    %cst_18 = arith.constant 1.000000e+00 : f32
    %65 = vector.broadcast %cst_17 : f32 to vector<8x128xf32>
    %66 = arith.maximumf %65, %64 : vector<8x128xf32>
    %67 = vector.broadcast %cst_18 : f32 to vector<8x128xf32>
    %68 = arith.minimumf %67, %66 : vector<8x128xf32>
    %c4_19 = arith.constant 4 : index
    %c0_20 = arith.constant 0 : index
    %c0_21 = arith.constant 0 : index
    %69 = vector.load %arg2[%c4_19, %c0_20, %c0_21] : memref<5x8x128xf32, #tpu.memory_space<vmem>>, vector<1x8x128xf32>
    %70 = vector.shape_cast %69 : vector<1x8x128xf32> to vector<8x128xf32>
    %c11 = arith.constant 11 : index
    %71 = memref.load %arg1[%c11] : memref<12xf32, #tpu.memory_space<smem>>
    %c9 = arith.constant 9 : index
    %72 = memref.load %arg1[%c9] : memref<12xf32, #tpu.memory_space<smem>>
    %cst_22 = arith.constant 1.000000e+00 : f32
    %73 = vector.broadcast %cst_22 : f32 to vector<8x128xf32>
    %74 = arith.subf %73, %70 : vector<8x128xf32>
    %75 = vector.broadcast %72 : f32 to vector<8x128xf32>
    %76 = arith.mulf %75, %74 : vector<8x128xf32>
    %77 = vector.broadcast %71 : f32 to vector<8x128xf32>
    %78 = arith.subf %77, %76 : vector<8x128xf32>
    %c10 = arith.constant 10 : index
    %79 = memref.load %arg1[%c10] : memref<12xf32, #tpu.memory_space<smem>>
    %cst_23 = arith.constant 1.000000e+00 : f32
    %80 = vector.broadcast %cst_23 : f32 to vector<8x128xf32>
    %81 = arith.subf %80, %68 : vector<8x128xf32>
    %82 = vector.broadcast %79 : f32 to vector<8x128xf32>
    %83 = arith.mulf %82, %81 : vector<8x128xf32>
    %84 = arith.subf %78, %83 : vector<8x128xf32>
    %cst_24 = arith.constant 0.000000e+00 : f32
    %cst_25 = arith.constant 1.000000e+00 : f32
    %85 = vector.broadcast %cst_24 : f32 to vector<8x128xf32>
    %86 = arith.maximumf %85, %84 : vector<8x128xf32>
    %87 = vector.broadcast %cst_25 : f32 to vector<8x128xf32>
    %88 = arith.minimumf %87, %86 : vector<8x128xf32>
    %c0_26 = arith.constant 0 : index
    %c0_27 = arith.constant 0 : index
    %89 = vector.load %arg3[%c0_26, %c0_27] : memref<8x128xf32, #tpu.memory_space<vmem>>, vector<8x128xf32>
    tpu.vector_store %arg3[%c0_26, %c0_27], %88 {strides = array<i32>} : memref<8x128xf32, #tpu.memory_space<vmem>>, vector<8x128xf32>,
    return
  }
  func.func @transform_0(%arg0: i32) -> i32 {
    %c0_i32 = arith.constant 0 : i32
    %c0_i32_0 = arith.constant 0 : i32
    return %c0_i32 : i32
  }
  func.func @transform_1(%arg0: i32) -> (i32, i32, i32) {
    %c0_i32 = arith.constant 0 : i32
    %c0_i32_0 = arith.constant 0 : i32
    %c0_i32_1 = arith.constant 0 : i32
    return %c0_i32, %arg0, %c0_i32_0 : i32, i32, i32
  }
  func.func @transform_2(%arg0: i32) -> (i32, i32) {
    %c0_i32 = arith.constant 0 : i32
    %c0_i32_0 = arith.constant 0 : i32
    return %arg0, %c0_i32 : i32, i32
  }
}

</mosaic_0001>

<llo_original>
// kernel: tpu_custom_call.1
$region0: #{tpu_custom_call.1}
  #allocation0 [shape = 'u32[]', space=smem, size = 0x4, offset = 0x4, fixed_abs, tag = 'smem constant byte address 0x4 - core index']
  #allocation1 [shape = 'u32[72,128]{1,0:T(1,128)}', space=vmem, size = 0x9000, scoped, tag = 'internal scratch']
  %s0 = inlined_call_operand.hbm [shape: f32[12], index: 0, kind: input, shape index: {}]
  %s1 = inlined_call_operand.hbm [shape: f32[5,8,128], index: 1, kind: input, shape index: {}]
  %s2 = inlined_call_operand.hbm [shape: f32[8,128], index: 2, kind: output, shape index: {}]
  %s3 = sld [smem:[#allocation0]]
  $region26: #{tpu_custom_call.1} parent=0
    _
  %s5 = ssub.s32 1, %s3
  %s6 = scalar_select 0, %s5, %s3
  $region1: #{tpu_custom_call.1} parent=0
    #allocation2 [shape = 'u8[512]{0}', space=smem, size = 0x200, scoped, tag = 'input window, operand 0, single buffered']
    #allocation3 [shape = 's32[1]{0}', space=sflag, size = 0x4, scoped, tag = 'scoped memory for tpu_custom_call.1']
    #allocation4 [shape = 's32[1]{0}', space=sflag, size = 0x4, scoped, tag = 'scoped memory for tpu_custom_call.1']
    #allocation5 [shape = 's32[1]{0}', space=sflag, size = 0x4, scoped, tag = 'scoped memory for tpu_custom_call.1']
    #allocation6 [shape = 'u8[20480]{0}', space=vmem, size = 0x5000, scoped, tag = 'input window, operand 1, single buffered']
    #allocation7 [shape = 'u8[4096]{0}', space=vmem, size = 0x1000, scoped, tag = 'output window, operand 0, single buffered']
    %7 = vsyncpa [#allocation5], 0
    %8 = vsyncpa [#allocation3], 0
    %9 = vsyncpa [#allocation4], 0
    // Predicated region
    $region2: #{tpu_custom_call.1} parent=1 // pred_check
      _
    $region3: #{tpu_custom_call.1} parent=1 // pred_check_branch
      %11 = sbr.rel (0) target = $region5
    $region4: #{tpu_custom_call.1} parent=1 // pred_region
      %13 = vsyncadd [#allocation5], 0
      %s15 = sshll.u32 %s0, 4
      %s16 = int_to_ptr.hbm [resolvable:$true] %s15
      %18 = dma.hbm_to_smem %s16, 16, [#allocation2], [#allocation5]
    $region5: #{tpu_custom_call.1} parent=1 // pred_fallthru
      _
    // Predicated region
    $region6: #{tpu_custom_call.1} parent=1 // pred_check
      _
    $region7: #{tpu_custom_call.1} parent=1 // pred_check_branch
      %20 = sbr.rel (0) target = $region9
    $region8: #{tpu_custom_call.1} parent=1 // pred_region
      %22 = vsyncadd [#allocation3], 0
      %s23 = sshll.u32 %s1, 4
      %s24 = int_to_ptr.hbm [resolvable:$true] %s23
      %s25 = sshll.u32 [#allocation6], 4
      %s26 = int_to_ptr.vmem [resolvable:$true] %s25
      %31 = dma.hbm_to_vmem [thread:$0]  %s24, 640, %s26, [#allocation3], 128, 128, 8
    $region9: #{tpu_custom_call.1} parent=1 // pred_fallthru
      _
    // Predicated region
    $region10: #{tpu_custom_call.1} parent=1 // pred_check
      _
    $region11: #{tpu_custom_call.1} parent=1 // pred_check_branch
      %33 = sbr.rel (0) target = $region13
    $region12: #{tpu_custom_call.1} parent=1 // pred_region
      %35 = dma.done [#allocation5], 16
    $region13: #{tpu_custom_call.1} parent=1 // pred_fallthru
      _
    // Predicated region
    $region14: #{tpu_custom_call.1} parent=1 // pred_check
      _
    $region15: #{tpu_custom_call.1} parent=1 // pred_check_branch
      %37 = sbr.rel (0) target = $region17
    $region16: #{tpu_custom_call.1} parent=1 // pred_region
      %39 = dma.done [#allocation3], 640
    $region17: #{tpu_custom_call.1} parent=1 // pred_fallthru
      _
    %40 = sfence
    %v41 = vld [vmem:[#allocation6] sm:$0xff]
    %s42 = sld [smem:[#allocation2]]
    %v43 = vstv %s42
    %v44 = vsub.f32 %v41, %v43
    %v45 = vxor.u32 %v44, 2147483648
    %v46 = vmul.f32 %v45, 1.442695
    %v47 = vpow.pop %v46
    %v48 = vadd.f32 %v47, 1.0
    %v49 = vrcp.pop %v48
    %v50 = vmul.f32 %v48, %v49
    %v51 = vsub.f32 1.0, %v50
    %v52 = vmul.f32 %v49, %v51
    %v53 = vadd.f32 %v49, %v52
    %vm54 = vweird.f32 %v48
    %vm55 = vweird.f32 %v49
    %vm56 = vmor %vm54, %vm55
    %v57 = vsel %vm56, %v49, %v53
    %v58 = vand.u32 2147483647, %v48
    %vm59 = vcmp.eq.f32.partialorder %v58, 8.507059e+37
    %v60 = vand.u32 %v48, 2147483648
    %v61 = vor.u32 1.1754944e-38, %v60
    %v62 = vsel %vm59, %v61, %v57
    %v63 = vmul.f32 1.0, %v62
    %v64 = vmul.f32 %v41, %v63
    %s65 = sld [smem:[#allocation2 + $0x4]]
    %v66 = vstv %s65
    %v67 = vmul.f32 %v66, %v64
    %v68 = vadd.f32 %v67, 0.0
    %s69 = scalar_lea.vmem [#allocation6], 8
    %v70 = vld [vmem:[%s69] sm:$0xff]
    %s71 = sld [smem:[#allocation2 + $0x1]]
    %v72 = vstv %s71
    %v73 = vsub.f32 %v70, %v72
    %v74 = vxor.u32 %v73, 2147483648
    %v75 = vmul.f32 %v74, 1.442695
    %v76 = vpow.pop %v75
    %v77 = vadd.f32 %v76, 1.0
    %v78 = vrcp.pop %v77
    %v79 = vmul.f32 %v77, %v78
    %v80 = vsub.f32 1.0, %v79
    %v81 = vmul.f32 %v78, %v80
    %v82 = vadd.f32 %v78, %v81
    %vm83 = vweird.f32 %v77
    %vm84 = vweird.f32 %v78
    %vm85 = vmor %vm83, %vm84
    %v86 = vsel %vm85, %v78, %v82
    %v87 = vand.u32 2147483647, %v77
    %vm88 = vcmp.eq.f32.partialorder %v87, 8.507059e+37
    %v89 = vand.u32 %v77, 2147483648
    %v90 = vor.u32 1.1754944e-38, %v89
    %v91 = vsel %vm88, %v90, %v86
    %v92 = vmul.f32 1.0, %v91
    %v93 = vmul.f32 %v70, %v92
    %s94 = sld [smem:[#allocation2 + $0x5]]
    %v95 = vstv %s94
    %v96 = vmul.f32 %v95, %v93
    %v97 = vadd.f32 %v68, %v96
    %s98 = scalar_lea.vmem [#allocation6], 16
    %v99 = vld [vmem:[%s98] sm:$0xff]
    %s100 = sld [smem:[#allocation2 + $0x2]]
    %v101 = vstv %s100
    %v102 = vsub.f32 %v99, %v101
    %v103 = vxor.u32 %v102, 2147483648
    %v104 = vmul.f32 %v103, 1.442695
    %v105 = vpow.pop %v104
    %v106 = vadd.f32 %v105, 1.0
    %v107 = vrcp.pop %v106
    %v108 = vmul.f32 %v106, %v107
    %v109 = vsub.f32 1.0, %v108
    %v110 = vmul.f32 %v107, %v109
    %v111 = vadd.f32 %v107, %v110
    %vm112 = vweird.f32 %v106
    %vm113 = vweird.f32 %v107
    %vm114 = vmor %vm112, %vm113
    %v115 = vsel %vm114, %v107, %v111
    %v116 = vand.u32 2147483647, %v106
    %vm117 = vcmp.eq.f32.partialorder %v116, 8.507059e+37
    %v118 = vand.u32 %v106, 2147483648
    %v119 = vor.u32 1.1754944e-38, %v118
    %v120 = vsel %vm117, %v119, %v115
    %v121 = vmul.f32 1.0, %v120
    %v122 = vmul.f32 %v99, %v121
    %s123 = sld [smem:[#allocation2 + $0x6]]
    %v124 = vstv %s123
    %v125 = vmul.f32 %v124, %v122
    %v126 = vadd.f32 %v97, %v125
    %s127 = scalar_lea.vmem [#allocation6], 24
    %v128 = vld [vmem:[%s127] sm:$0xff]
    %s129 = sld [smem:[#allocation2 + $0x3]]
    %v130 = vstv %s129
    %v131 = vsub.f32 %v128, %v130
    %v132 = vxor.u32 %v131, 2147483648
    %v133 = vmul.f32 %v132, 1.442695
    %v134 = vpow.pop %v133
    %v135 = vadd.f32 %v134, 1.0
    %v136 = vrcp.pop %v135
    %v137 = vmul.f32 %v135, %v136
    %v138 = vsub.f32 1.0, %v137
    %v139 = vmul.f32 %v136, %v138
    %v140 = vadd.f32 %v136, %v139
    %vm141 = vweird.f32 %v135
    %vm142 = vweird.f32 %v136
    %vm143 = vmor %vm141, %vm142
    %v144 = vsel %vm143, %v136, %v140
    %v145 = vand.u32 2147483647, %v135
    %vm146 = vcmp.eq.f32.partialorder %v145, 8.507059e+37
    %v147 = vand.u32 %v135, 2147483648
    %v148 = vor.u32 1.1754944e-38, %v147
    %v149 = vsel %vm146, %v148, %v144
    %v150 = vmul.f32 1.0, %v149
    %v151 = vmul.f32 %v128, %v150
    %s152 = sld [smem:[#allocation2 + $0x7]]
    %v153 = vstv %s152
    %v154 = vmul.f32 %v153, %v151
    %v155 = vadd.f32 %v126, %v154
    %s156 = sld [smem:[#allocation2 + $0x8]]
    %s157 = ssub.f32 1.0, %s156
    %v158 = vstv %s157
    %v159 = vadd.f32 %v158, %v155
    %v160 = vmax.f32 %v159, 0.0
    %v161 = vmin.f32 %v160, 1.0
    %s162 = scalar_lea.vmem [#allocation6], 32
    %v163 = vld [vmem:[%s162] sm:$0xff]
    %s164 = sld [smem:[#allocation2 + $0xb]]
    %s165 = sld [smem:[#allocation2 + $0x9]]
    %v166 = vsub.f32 1.0, %v163
    %v167 = vstv %s165
    %v168 = vmul.f32 %v167, %v166
    %v169 = vstv %s164
    %v170 = vsub.f32 %v169, %v168
    %s171 = sld [smem:[#allocation2 + $0xa]]
    %v172 = vsub.f32 1.0, %v161
    %v173 = vstv %s171
    %v174 = vmul.f32 %v173, %v172
    %v175 = vsub.f32 %v170, %v174
    %v176 = vmax.f32 %v175, 0.0
    %v177 = vmin.f32 %v176, 1.0
    %178 = vst [vmem:[#allocation7] sm:$0xff] %v177
    // Predicated region
    $region18: #{tpu_custom_call.1} parent=1 // pred_check
      _
    $region19: #{tpu_custom_call.1} parent=1 // pred_check_branch
      %180 = sbr.rel (0) target = $region21
    $region20: #{tpu_custom_call.1} parent=1 // pred_region
      %182 = vsyncadd [#allocation4], 0
      %s184 = sshll.u32 [#allocation7], 4
      %s185 = int_to_ptr.vmem [resolvable:$true] %s184
      %s186 = sshll.u32 %s2, 4
      %s187 = int_to_ptr.hbm [resolvable:$true] %s186
      %189 = dma.vmem_to_hbm [thread:$0]  %s185, 128, %s187, [#allocation4]
    $region21: #{tpu_custom_call.1} parent=1 // pred_fallthru
      _
    // Predicated region
    $region22: #{tpu_custom_call.1} parent=1 // pred_check
      _
    $region23: #{tpu_custom_call.1} parent=1 // pred_check_branch
      %191 = sbr.rel (0) target = $region25
    $region24: #{tpu_custom_call.1} parent=1 // pred_region
      %193 = dma.done [#allocation4], 128
    $region25: #{tpu_custom_call.1} parent=1 // pred_fallthru
      _
    %194 = vsyncpa [#allocation3], 1
    %195 = vsyncpa [#allocation4], 1
    %196 = vsyncpa [#allocation5], 1

</llo_original>
